<compile_context>
chip_gen: v7x
topology: tpu7x:2x2x1
jax: 0.10.0
libtpu: 0.0.40
codegen_flags: <defaults>
</compile_context>

<pallas_src>
import math

import numpy as np
import jax
import jax.numpy as jnp
from jax import lax
from jax.experimental import pallas as pl

# ----------------------------- config ---------------------------------------
HIDDEN = 32            # hidden_size
N_HEAD = 4             # n_head
HEAD_DIM = HIDDEN // N_HEAD
FFN = HIDDEN * 4
LN_EPS = 1e-5
B, LQ, LM = 2, 8, 8    # batch, query length, memory length
NEG_BIG = -1e30

R = B * LQ             # query rows with batch folded in
RM = B * LM            # memory rows with batch folded in (= one head segment width)
SC = N_HEAD * RM       # score columns (head-stacked)

# ---- packed parameter/constant slab layout: (P_ROWS, 128) f32, row offsets ----
P_LANES = max(FFN, 4 * HIDDEN)            # 128
ROW_WBIG = 0                              # (2H,128): [[wq^T/sqrt(hd), 0, wo^T],[0, wk^T|wv^T, 0]]
ROW_W1 = ROW_WBIG + 2 * HIDDEN            # (H, FFN): linear1.weight^T
ROW_W2 = ROW_W1 + HIDDEN                  # (FFN, H): linear2.weight^T (lanes 0:H)
ROW_VEC = ROW_W2 + FFN                    # (8, 128): one bias/LN vector per row (one vreg tile)
ROW_HM = ROW_VEC + 8                      # (SC, 2H): head mask for stacked [k | v]
ROW_SEG = ROW_HM + SC                     # (SC, SC): per-head segment-sum / selector matrix
ROW_BIAS = ROW_SEG + SC                   # (R, SC):  0 / NEG_BIG cross-batch mask
P_ROWS = ROW_BIAS + R                     # 376


def _layernorm(x, gamma, beta):
    mu = jnp.mean(x, axis=-1, keepdims=True)
    var = jnp.mean(jnp.square(x - mu), axis=-1, keepdims=True)
    return (x - mu) * lax.rsqrt(var + LN_EPS) * gamma + beta


def _gelu_exact(x):
    # nn.GELU() default (erf-based) variant — kept exact to preserve module semantics.
    return 0.5 * x * (1.0 + lax.erf(x * (1.0 / math.sqrt(2.0))))


# ------------------------------ kernel ---------------------------------------
def cross_modal_kernel(xm_ref, p_ref, o_ref):
    xm = xm_ref[...]                          # (R, 2H) = [query | memory], batch folded into rows
    x = xm[:, 0:HIDDEN]                       # residual input (query)

    vecs = p_ref[ROW_VEC:ROW_VEC + 8, :]      # (8, 128): every 1-row parameter, one vreg tile

    # Fused projection: [x|mem] @ block-diag -> [q_scaled | k | v | *] in one MXU pass.
    # (softmax scale pre-folded into wq/bq; lanes 96:128 carry wo^T and produce unused cols.)
    qkvo = jnp.dot(xm, p_ref[ROW_WBIG:ROW_WBIG + 2 * HIDDEN, :],
                   preferred_element_type=jnp.float32) + vecs[0:1, :]
    q = qkvo[:, 0:HIDDEN]
    kv = qkvo[:, HIDDEN:3 * HIDDEN]           # (R, 2H) = [k | v]

    # Head-stacked, head-masked K|V: row order = (head, batch, key_pos); one shared mask.
    kvt = jnp.concatenate([kv] * N_HEAD, axis=0)                    # (SC, 2H)
    mkv = kvt * p_ref[ROW_HM:ROW_HM + SC, 0:2 * HIDDEN]
    mk = mkv[:, 0:HIDDEN]
    mv = mkv[:, HIDDEN:2 * HIDDEN]

    # Scores for ALL heads and batches in one MXU op; cross-batch cols killed by additive bias.
    s = lax.dot_general(q, mk, (((1,), (1,)), ((), ())),
                        preferred_element_type=jnp.float32)         # (R, SC)
    s = s + p_ref[ROW_BIAS:ROW_BIAS + R, 0:SC]

    segsum = p_ref[ROW_SEG:ROW_SEG + SC, 0:SC]                      # (SC, SC) 0/1 constant

    # Per-HEAD max (exact softmax even if one head's scores dwarf another's).
    # Rows of segsum double as head-segment column selectors, so no extra constant needed.
    m_full = None
    for h in range(N_HEAD):
        mh = jnp.max(s[:, h * RM:(h + 1) * RM], axis=-1, keepdims=True)   # (R, 1)
        term = mh * segsum[h * RM:h * RM + 1, :]                          # (R, SC)
        m_full = term if m_full is None else m_full + term
    e = jnp.exp(s - m_full)                   # exactly 0 on cross-batch columns

    # Per-(head, valid-batch) denominators broadcast back via one small matmul; d >= 1 always.
    d = jnp.dot(e, segsum, preferred_element_type=jnp.float32)
    p = e * pl.reciprocal(d, approx=True)

    ctx = jnp.dot(p, mv, preferred_element_type=jnp.float32)        # (R, H), heads already concat
    attn = jnp.dot(ctx, p_ref[ROW_WBIG:ROW_WBIG + HIDDEN, 3 * HIDDEN:4 * HIDDEN],
                   preferred_element_type=jnp.float32) + vecs[1:2, 0:HIDDEN]

    # dropout layers are identity in eval mode
    y1 = _layernorm(x + attn, vecs[2:3, 0:HIDDEN], vecs[3:4, 0:HIDDEN])

    h1 = _gelu_exact(jnp.dot(y1, p_ref[ROW_W1:ROW_W1 + HIDDEN, :],
                             preferred_element_type=jnp.float32) + vecs[4:5, :])
    ffn = jnp.dot(h1, p_ref[ROW_W2:ROW_W2 + FFN, 0:HIDDEN],
                  preferred_element_type=jnp.float32) + vecs[5:6, 0:HIDDEN]
    o_ref[...] = _layernorm(y1 + ffn, vecs[6:7, 0:HIDDEN], vecs[7:8, 0:HIDDEN])


# ------------------------------ wrapper ---------------------------------------
def cross_modal_encoder(query, memory, packed):
    bsz, lq, hidden = query.shape
    _, lm, _ = memory.shape
    assert (bsz, lq, lm, hidden) == (B, LQ, LM, HIDDEN), "packed slab is shape-specialized"
    assert lq == lm, "fused [x|mem] block-diagonal projection requires lq == lm"
    xq = query.reshape(bsz * lq, hidden)
    xm = memory.reshape(bsz * lm, hidden)
    fused = jnp.concatenate([xq, xm], axis=-1)     # (R, 2H) — layout plumbing only

    out = pl.pallas_call(
        cross_modal_kernel,
        out_shape=jax.ShapeDtypeStruct((bsz * lq, hidden), jnp.float32),
        # single invocation: no grid, whole problem resident in VMEM, no pipelining state
    )(fused, packed)
    return out.reshape(bsz, lq, hidden)


# --------------------------- parameter init ------------------------------------
def init_params(key):
    keys = jax.random.split(key, 8)
    s = 0.05
    in_proj_w = jax.random.normal(keys[0], (3 * HIDDEN, HIDDEN), jnp.float32) * s
    in_proj_b = jax.random.normal(keys[1], (3 * HIDDEN,), jnp.float32) * s
    out_proj_w = jax.random.normal(keys[2], (HIDDEN, HIDDEN), jnp.float32) * s
    out_proj_b = jax.random.normal(keys[3], (HIDDEN,), jnp.float32) * s
    ln1_g = jnp.ones((HIDDEN,), jnp.float32)
    ln1_b = jnp.zeros((HIDDEN,), jnp.float32)
    w1 = jax.random.normal(keys[4], (FFN, HIDDEN), jnp.float32) * s
    b1 = jax.random.normal(keys[5], (FFN,), jnp.float32) * s
    w2 = jax.random.normal(keys[6], (HIDDEN, FFN), jnp.float32) * s
    b2 = jax.random.normal(keys[7], (HIDDEN,), jnp.float32) * s
    ln2_g = jnp.ones((HIDDEN,), jnp.float32)
    ln2_b = jnp.zeros((HIDDEN,), jnp.float32)

    wq, wk, wv = jnp.split(in_proj_w, 3, axis=0)    # each (H, H), PyTorch (out, in)
    bq, bk, bv = jnp.split(in_proj_b, 3, axis=0)

    scale = 1.0 / math.sqrt(HEAD_DIM)
    P = np.zeros((P_ROWS, P_LANES), np.float32)

    # Block-diagonal fused projection weight (+ wo^T in the spare lanes).
    P[0:HIDDEN, 0:HIDDEN] = np.asarray(wq).T * scale
    P[HIDDEN:2 * HIDDEN, HIDDEN:2 * HIDDEN] = np.asarray(wk).T
    P[HIDDEN:2 * HIDDEN, 2 * HIDDEN:3 * HIDDEN] = np.asarray(wv).T
    P[0:HIDDEN, 3 * HIDDEN:4 * HIDDEN] = np.asarray(out_proj_w).T
    # FFN weights (pre-transposed to (in, out)).
    P[ROW_W1:ROW_W1 + HIDDEN, 0:FFN] = np.asarray(w1).T
    P[ROW_W2:ROW_W2 + FFN, 0:HIDDEN] = np.asarray(w2).T
    # Bias / LayerNorm vectors, one per row of a single (8, 128) tile.
    P[ROW_VEC + 0, 0:HIDDEN] = np.asarray(bq) * scale
    P[ROW_VEC + 0, HIDDEN:2 * HIDDEN] = np.asarray(bk)
    P[ROW_VEC + 0, 2 * HIDDEN:3 * HIDDEN] = np.asarray(bv)
    P[ROW_VEC + 1, 0:HIDDEN] = np.asarray(out_proj_b)
    P[ROW_VEC + 2, 0:HIDDEN] = np.asarray(ln1_g)
    P[ROW_VEC + 3, 0:HIDDEN] = np.asarray(ln1_b)
    P[ROW_VEC + 4, 0:FFN] = np.asarray(b1)
    P[ROW_VEC + 5, 0:HIDDEN] = np.asarray(b2)
    P[ROW_VEC + 6, 0:HIDDEN] = np.asarray(ln2_g)
    P[ROW_VEC + 7, 0:HIDDEN] = np.asarray(ln2_b)
    # Hoisted shape constants.
    rr = np.arange(SC)[:, None]
    cc = np.arange(2 * HIDDEN)[None, :]
    P[ROW_HM:ROW_HM + SC, 0:2 * HIDDEN] = (
        (rr // RM) == ((cc % HIDDEN) // HEAD_DIM)).astype(np.float32)
    c1 = np.arange(SC)[:, None]
    c2 = np.arange(SC)[None, :]
    P[ROW_SEG:ROW_SEG + SC, 0:SC] = ((c1 // RM) == (c2 // RM)).astype(np.float32)
    rq = np.arange(R)[:, None]
    ck = np.arange(SC)[None, :]
    valid = (rq // LQ) == ((ck % RM) // LM)
    P[ROW_BIAS:ROW_BIAS + R, 0:SC] = np.where(valid, 0.0, NEG_BIG).astype(np.float32)

    packed = jnp.asarray(P)
    raw = dict(wq=wq, wk=wk, wv=wv, bq=bq, bk=bk, bv=bv,
               wo=out_proj_w, bo=out_proj_b, ln1_g=ln1_g, ln1_b=ln1_b,
               w1=w1, b1=b1, w2=w2, b2=b2, ln2_g=ln2_g, ln2_b=ln2_b)
    return packed, raw


# ------------------------ pure-JAX reference (for check) -----------------------
def reference(query, memory, p):
    def ln(x, g, b):
        mu = jnp.mean(x, -1, keepdims=True)
        var = jnp.mean((x - mu) ** 2, -1, keepdims=True)
        return (x - mu) / jnp.sqrt(var + LN_EPS) * g + b

    q = query @ p["wq"].T + p["bq"]
    k = memory @ p["wk"].T + p["bk"]
    v = memory @ p["wv"].T + p["bv"]

    def heads(t):
        Bv, L, _ = t.shape
        return t.reshape(Bv, L, N_HEAD, HEAD_DIM).transpose(0, 2, 1, 3)

    qh, kh, vh = heads(q), heads(k), heads(v)
    s = jnp.einsum("bhqd,bhkd->bhqk", qh, kh) / math.sqrt(HEAD_DIM)
    a = jax.nn.softmax(s, axis=-1)
    ctx = jnp.einsum("bhqk,bhkd->bhqd", a, vh).transpose(0, 2, 1, 3)
    ctx = ctx.reshape(query.shape)
    attn = ctx @ p["wo"].T + p["bo"]
    y1 = ln(query + attn, p["ln1_g"], p["ln1_b"])
    pre = y1 @ p["w1"].T + p["b1"]
    h = 0.5 * pre * (1.0 + jax.lax.erf(pre / math.sqrt(2.0)))
    ffn = h @ p["w2"].T + p["b2"]
    return ln(y1 + ffn, p["ln2_g"], p["ln2_b"])


if __name__ == "__main__":
    key = jax.random.PRNGKey(0)
    k_q, k_m, k_p = jax.random.split(key, 3)
    query = jax.random.normal(k_q, (B, LQ, HIDDEN), jnp.float32)
    memory = jax.random.normal(k_m, (B, LM, HIDDEN), jnp.float32)

    packed_params, raw_params = init_params(k_p)

    encoder = jax.jit(cross_modal_encoder)
    out = encoder(query, memory, packed_params)
    out = jax.block_until_ready(out)

    ref = reference(query, memory, raw_params)
    assert out.shape == (B, LQ, HIDDEN)
    # Tolerance 2e-3 covers the approximate EUP reciprocal used for the softmax denominator.
    assert jnp.allclose(out, ref, atol=2e-3, rtol=2e-3), "mismatch vs JAX reference"

    print("KERNEL_OK")
</pallas_src>

<mosaic_0001>
module attributes {stable_mosaic.version = 11 : i64} {
  func.func @cross_modal_kernel(%arg0: memref<16x64xf32, #tpu.memory_space<vmem>>, %arg1: memref<376x128xf32, #tpu.memory_space<vmem>>, %arg2: memref<16x32xf32, #tpu.memory_space<vmem>>) attributes {dimension_semantics = [], scalar_prefetch = 0 : i64, scratch_operands = 0 : i64, tpu.core_type = #tpu.core_type<tc>} {
    %c0 = arith.constant 0 : index
    %c0_0 = arith.constant 0 : index
    %0 = vector.load %arg0[%c0, %c0_0] : memref<16x64xf32, #tpu.memory_space<vmem>>, vector<16x64xf32>
    %1 = vector.extract_strided_slice %0 {offsets = [0, 0], sizes = [16, 32], strides = [1, 1]} : vector<16x64xf32> to vector<16x32xf32>
    %c224 = arith.constant 224 : index
    %c0_1 = arith.constant 0 : index
    %2 = vector.load %arg1[%c224, %c0_1] : memref<376x128xf32, #tpu.memory_space<vmem>>, vector<8x128xf32>
    %c0_2 = arith.constant 0 : index
    %c0_3 = arith.constant 0 : index
    %3 = vector.load %arg1[%c0_2, %c0_3] : memref<376x128xf32, #tpu.memory_space<vmem>>, vector<64x128xf32>
    %cst = arith.constant dense<0.000000e+00> : vector<16x128xf32>
    %4 = tpu.matmul %0, %3, %cst {dimension_numbers = #tpu.dot_dimension_numbers<[1], [0], [0], [1], [0, 0, 1, 1], [], []>} : vector<16x64xf32>, vector<64x128xf32>, vector<16x128xf32> -> vector<16x128xf32>
    %5 = vector.extract_strided_slice %2 {offsets = [0, 0], sizes = [1, 128], strides = [1, 1]} : vector<8x128xf32> to vector<1x128xf32>
    %6 = vector.broadcast %5 : vector<1x128xf32> to vector<16x128xf32>
    %7 = arith.addf %4, %6 : vector<16x128xf32>
    %8 = vector.extract_strided_slice %7 {offsets = [0, 0], sizes = [16, 32], strides = [1, 1]} : vector<16x128xf32> to vector<16x32xf32>
    %9 = vector.extract_strided_slice %7 {offsets = [0, 32], sizes = [16, 64], strides = [1, 1]} : vector<16x128xf32> to vector<16x64xf32>
    %10 = tpu.concatenate %9, %9, %9, %9 in 0 : vector<16x64xf32>, vector<16x64xf32>, vector<16x64xf32>, vector<16x64xf32> -> vector<64x64xf32>
    %c232 = arith.constant 232 : index
    %c0_4 = arith.constant 0 : index
    %11 = vector.load %arg1[%c232, %c0_4] : memref<376x128xf32, #tpu.memory_space<vmem>>, vector<64x64xf32>
    %12 = arith.mulf %10, %11 : vector<64x64xf32>
    %13 = vector.extract_strided_slice %12 {offsets = [0, 0], sizes = [64, 32], strides = [1, 1]} : vector<64x64xf32> to vector<64x32xf32>
    %14 = vector.extract_strided_slice %12 {offsets = [0, 32], sizes = [64, 32], strides = [1, 1]} : vector<64x64xf32> to vector<64x32xf32>
    %cst_5 = arith.constant dense<0.000000e+00> : vector<16x64xf32>
    %15 = tpu.matmul %8, %13, %cst_5 {dimension_numbers = #tpu.dot_dimension_numbers<[1], [1], [0], [0], [0, 0, 1, 0], [], []>} : vector<16x32xf32>, vector<64x32xf32>, vector<16x64xf32> -> vector<16x64xf32>
    %c360 = arith.constant 360 : index
    %c0_6 = arith.constant 0 : index
    %16 = vector.load %arg1[%c360, %c0_6] : memref<376x128xf32, #tpu.memory_space<vmem>>, vector<16x64xf32>
    %17 = arith.addf %15, %16 : vector<16x64xf32>
    %c296 = arith.constant 296 : index
    %c0_7 = arith.constant 0 : index
    %18 = vector.load %arg1[%c296, %c0_7] : memref<376x128xf32, #tpu.memory_space<vmem>>, vector<64x64xf32>
    %19 = vector.extract_strided_slice %17 {offsets = [0, 0], sizes = [16, 16], strides = [1, 1]} : vector<16x64xf32> to vector<16x16xf32>
    %cst_8 = arith.constant dense<0xFF800000> : vector<16xf32>
    %20 = vector.multi_reduction <maximumf>, %19, %cst_8 [1] : vector<16x16xf32> to vector<16xf32>
    %21 = vector.shape_cast %20 : vector<16xf32> to vector<16x1xf32>
    %22 = vector.extract_strided_slice %18 {offsets = [0, 0], sizes = [1, 64], strides = [1, 1]} : vector<64x64xf32> to vector<1x64xf32>
    %23 = vector.broadcast %21 : vector<16x1xf32> to vector<16x64xf32>
    %24 = vector.broadcast %22 : vector<1x64xf32> to vector<16x64xf32>
    %25 = arith.mulf %23, %24 : vector<16x64xf32>
    %26 = vector.extract_strided_slice %17 {offsets = [0, 16], sizes = [16, 16], strides = [1, 1]} : vector<16x64xf32> to vector<16x16xf32>
    %cst_9 = arith.constant dense<0xFF800000> : vector<16xf32>
    %27 = vector.multi_reduction <maximumf>, %26, %cst_9 [1] : vector<16x16xf32> to vector<16xf32>
    %28 = vector.shape_cast %27 : vector<16xf32> to vector<16x1xf32>
    %29 = vector.extract_strided_slice %18 {offsets = [16, 0], sizes = [1, 64], strides = [1, 1]} : vector<64x64xf32> to vector<1x64xf32>
    %30 = vector.broadcast %28 : vector<16x1xf32> to vector<16x64xf32>
    %31 = vector.broadcast %29 : vector<1x64xf32> to vector<16x64xf32>
    %32 = arith.mulf %30, %31 : vector<16x64xf32>
    %33 = arith.addf %25, %32 : vector<16x64xf32>
    %34 = vector.extract_strided_slice %17 {offsets = [0, 32], sizes = [16, 16], strides = [1, 1]} : vector<16x64xf32> to vector<16x16xf32>
    %cst_10 = arith.constant dense<0xFF800000> : vector<16xf32>
    %35 = vector.multi_reduction <maximumf>, %34, %cst_10 [1] : vector<16x16xf32> to vector<16xf32>
    %36 = vector.shape_cast %35 : vector<16xf32> to vector<16x1xf32>
    %37 = vector.extract_strided_slice %18 {offsets = [32, 0], sizes = [1, 64], strides = [1, 1]} : vector<64x64xf32> to vector<1x64xf32>
    %38 = vector.broadcast %36 : vector<16x1xf32> to vector<16x64xf32>
    %39 = vector.broadcast %37 : vector<1x64xf32> to vector<16x64xf32>
    %40 = arith.mulf %38, %39 : vector<16x64xf32>
    %41 = arith.addf %33, %40 : vector<16x64xf32>
    %42 = vector.extract_strided_slice %17 {offsets = [0, 48], sizes = [16, 16], strides = [1, 1]} : vector<16x64xf32> to vector<16x16xf32>
    %cst_11 = arith.constant dense<0xFF800000> : vector<16xf32>
    %43 = vector.multi_reduction <maximumf>, %42, %cst_11 [1] : vector<16x16xf32> to vector<16xf32>
    %44 = vector.shape_cast %43 : vector<16xf32> to vector<16x1xf32>
    %45 = vector.extract_strided_slice %18 {offsets = [48, 0], sizes = [1, 64], strides = [1, 1]} : vector<64x64xf32> to vector<1x64xf32>
    %46 = vector.broadcast %44 : vector<16x1xf32> to vector<16x64xf32>
    %47 = vector.broadcast %45 : vector<1x64xf32> to vector<16x64xf32>
    %48 = arith.mulf %46, %47 : vector<16x64xf32>
    %49 = arith.addf %41, %48 : vector<16x64xf32>
    %50 = arith.subf %17, %49 : vector<16x64xf32>
    %51 = math.exp %50 : vector<16x64xf32>
    %cst_12 = arith.constant dense<0.000000e+00> : vector<16x64xf32>
    %52 = tpu.matmul %51, %18, %cst_12 {dimension_numbers = #tpu.dot_dimension_numbers<[1], [0], [0], [1], [0, 0, 1, 1], [], []>} : vector<16x64xf32>, vector<64x64xf32>, vector<16x64xf32> -> vector<16x64xf32>
    %53 = tpu.reciprocal %52 {approx = true} : vector<16x64xf32> -> vector<16x64xf32>
    %54 = arith.mulf %51, %53 : vector<16x64xf32>
    %cst_13 = arith.constant dense<0.000000e+00> : vector<16x32xf32>
    %55 = tpu.matmul %54, %14, %cst_13 {dimension_numbers = #tpu.dot_dimension_numbers<[1], [0], [0], [1], [0, 0, 1, 1], [], []>} : vector<16x64xf32>, vector<64x32xf32>, vector<16x32xf32> -> vector<16x32xf32>
    %c0_14 = arith.constant 0 : index
    %c96 = arith.constant 96 : index
    %56 = vector.load %arg1[%c0_14, %c96] : memref<376x128xf32, #tpu.memory_space<vmem>>, vector<32x32xf32>
    %cst_15 = arith.constant dense<0.000000e+00> : vector<16x32xf32>
    %57 = tpu.matmul %55, %56, %cst_15 {dimension_numbers = #tpu.dot_dimension_numbers<[1], [0], [0], [1], [0, 0, 1, 1], [], []>} : vector<16x32xf32>, vector<32x32xf32>, vector<16x32xf32> -> vector<16x32xf32>
    %58 = vector.extract_strided_slice %2 {offsets = [1, 0], sizes = [1, 32], strides = [1, 1]} : vector<8x128xf32> to vector<1x32xf32>
    %59 = vector.broadcast %58 : vector<1x32xf32> to vector<16x32xf32>
    %60 = arith.addf %57, %59 : vector<16x32xf32>
    %61 = arith.addf %1, %60 : vector<16x32xf32>
    %62 = vector.extract_strided_slice %2 {offsets = [2, 0], sizes = [1, 32], strides = [1, 1]} : vector<8x128xf32> to vector<1x32xf32>
    %63 = vector.extract_strided_slice %2 {offsets = [3, 0], sizes = [1, 32], strides = [1, 1]} : vector<8x128xf32> to vector<1x32xf32>
    %cst_16 = arith.constant dense<0.000000e+00> : vector<16xf32>
    %64 = vector.multi_reduction <add>, %61, %cst_16 [1] : vector<16x32xf32> to vector<16xf32>
    %65 = vector.shape_cast %64 : vector<16xf32> to vector<16x1xf32>
    %cst_17 = arith.constant 3.200000e+01 : f32
    %66 = vector.broadcast %cst_17 : f32 to vector<16x1xf32>
    %67 = arith.divf %65, %66 : vector<16x1xf32>
    %68 = vector.broadcast %67 : vector<16x1xf32> to vector<16x32xf32>
    %69 = arith.subf %61, %68 : vector<16x32xf32>
    %70 = arith.mulf %69, %69 : vector<16x32xf32>
    %cst_18 = arith.constant dense<0.000000e+00> : vector<16xf32>
    %71 = vector.multi_reduction <add>, %70, %cst_18 [1] : vector<16x32xf32> to vector<16xf32>
    %72 = vector.shape_cast %71 : vector<16xf32> to vector<16x1xf32>
    %cst_19 = arith.constant 3.200000e+01 : f32
    %73 = vector.broadcast %cst_19 : f32 to vector<16x1xf32>
    %74 = arith.divf %72, %73 : vector<16x1xf32>
    %75 = vector.broadcast %67 : vector<16x1xf32> to vector<16x32xf32>
    %76 = arith.subf %61, %75 : vector<16x32xf32>
    %cst_20 = arith.constant 9.99999974E-6 : f32
    %77 = vector.broadcast %cst_20 : f32 to vector<16x1xf32>
    %78 = arith.addf %74, %77 : vector<16x1xf32>
    %79 = math.rsqrt %78 : vector<16x1xf32>
    %80 = vector.broadcast %79 : vector<16x1xf32> to vector<16x32xf32>
    %81 = arith.mulf %76, %80 : vector<16x32xf32>
    %82 = vector.broadcast %62 : vector<1x32xf32> to vector<16x32xf32>
    %83 = arith.mulf %81, %82 : vector<16x32xf32>
    %84 = vector.broadcast %63 : vector<1x32xf32> to vector<16x32xf32>
    %85 = arith.addf %83, %84 : vector<16x32xf32>
    %c64 = arith.constant 64 : index
    %c0_21 = arith.constant 0 : index
    %86 = vector.load %arg1[%c64, %c0_21] : memref<376x128xf32, #tpu.memory_space<vmem>>, vector<32x128xf32>
    %cst_22 = arith.constant dense<0.000000e+00> : vector<16x128xf32>
    %87 = tpu.matmul %85, %86, %cst_22 {dimension_numbers = #tpu.dot_dimension_numbers<[1], [0], [0], [1], [0, 0, 1, 1], [], []>} : vector<16x32xf32>, vector<32x128xf32>, vector<16x128xf32> -> vector<16x128xf32>
    %88 = vector.extract_strided_slice %2 {offsets = [4, 0], sizes = [1, 128], strides = [1, 1]} : vector<8x128xf32> to vector<1x128xf32>
    %89 = vector.broadcast %88 : vector<1x128xf32> to vector<16x128xf32>
    %90 = arith.addf %87, %89 : vector<16x128xf32>
    %cst_23 = arith.constant 5.000000e-01 : f32
    %91 = vector.broadcast %cst_23 : f32 to vector<16x128xf32>
    %92 = arith.mulf %91, %90 : vector<16x128xf32>
    %cst_24 = arith.constant 0.707106769 : f32
    %93 = vector.broadcast %cst_24 : f32 to vector<16x128xf32>
    %94 = arith.mulf %90, %93 : vector<16x128xf32>
    %95 = math.erf %94 : vector<16x128xf32>
    %cst_25 = arith.constant 1.000000e+00 : f32
    %96 = vector.broadcast %cst_25 : f32 to vector<16x128xf32>
    %97 = arith.addf %96, %95 : vector<16x128xf32>
    %98 = arith.mulf %92, %97 : vector<16x128xf32>
    %c96_26 = arith.constant 96 : index
    %c0_27 = arith.constant 0 : index
    %99 = vector.load %arg1[%c96_26, %c0_27] : memref<376x128xf32, #tpu.memory_space<vmem>>, vector<128x32xf32>
    %cst_28 = arith.constant dense<0.000000e+00> : vector<16x32xf32>
    %100 = tpu.matmul %98, %99, %cst_28 {dimension_numbers = #tpu.dot_dimension_numbers<[1], [0], [0], [1], [0, 0, 1, 1], [], []>} : vector<16x128xf32>, vector<128x32xf32>, vector<16x32xf32> -> vector<16x32xf32>
    %101 = vector.extract_strided_slice %2 {offsets = [5, 0], sizes = [1, 32], strides = [1, 1]} : vector<8x128xf32> to vector<1x32xf32>
    %102 = vector.broadcast %101 : vector<1x32xf32> to vector<16x32xf32>
    %103 = arith.addf %100, %102 : vector<16x32xf32>
    %104 = arith.addf %85, %103 : vector<16x32xf32>
    %105 = vector.extract_strided_slice %2 {offsets = [6, 0], sizes = [1, 32], strides = [1, 1]} : vector<8x128xf32> to vector<1x32xf32>
    %106 = vector.extract_strided_slice %2 {offsets = [7, 0], sizes = [1, 32], strides = [1, 1]} : vector<8x128xf32> to vector<1x32xf32>
    %cst_29 = arith.constant dense<0.000000e+00> : vector<16xf32>
    %107 = vector.multi_reduction <add>, %104, %cst_29 [1] : vector<16x32xf32> to vector<16xf32>
    %108 = vector.shape_cast %107 : vector<16xf32> to vector<16x1xf32>
    %cst_30 = arith.constant 3.200000e+01 : f32
    %109 = vector.broadcast %cst_30 : f32 to vector<16x1xf32>
    %110 = arith.divf %108, %109 : vector<16x1xf32>
    %111 = vector.broadcast %110 : vector<16x1xf32> to vector<16x32xf32>
    %112 = arith.subf %104, %111 : vector<16x32xf32>
    %113 = arith.mulf %112, %112 : vector<16x32xf32>
    %cst_31 = arith.constant dense<0.000000e+00> : vector<16xf32>
    %114 = vector.multi_reduction <add>, %113, %cst_31 [1] : vector<16x32xf32> to vector<16xf32>
    %115 = vector.shape_cast %114 : vector<16xf32> to vector<16x1xf32>
    %cst_32 = arith.constant 3.200000e+01 : f32
    %116 = vector.broadcast %cst_32 : f32 to vector<16x1xf32>
    %117 = arith.divf %115, %116 : vector<16x1xf32>
    %118 = vector.broadcast %110 : vector<16x1xf32> to vector<16x32xf32>
    %119 = arith.subf %104, %118 : vector<16x32xf32>
    %cst_33 = arith.constant 9.99999974E-6 : f32
    %120 = vector.broadcast %cst_33 : f32 to vector<16x1xf32>
    %121 = arith.addf %117, %120 : vector<16x1xf32>
    %122 = math.rsqrt %121 : vector<16x1xf32>
    %123 = vector.broadcast %122 : vector<16x1xf32> to vector<16x32xf32>
    %124 = arith.mulf %119, %123 : vector<16x32xf32>
    %125 = vector.broadcast %105 : vector<1x32xf32> to vector<16x32xf32>
    %126 = arith.mulf %124, %125 : vector<16x32xf32>
    %127 = vector.broadcast %106 : vector<1x32xf32> to vector<16x32xf32>
    %128 = arith.addf %126, %127 : vector<16x32xf32>
    %c0_34 = arith.constant 0 : index
    %c0_35 = arith.constant 0 : index
    %129 = vector.load %arg2[%c0_34, %c0_35] : memref<16x32xf32, #tpu.memory_space<vmem>>, vector<16x32xf32>
    tpu.vector_store %arg2[%c0_34, %c0_35], %128 {strides = array<i32>} : memref<16x32xf32, #tpu.memory_space<vmem>>, vector<16x32xf32>,
    return
  }
}

</mosaic_0001>

<llo_original>
// kernel: cross_modal_encoder.1
$region0: #{cross_modal_encoder.1}
  #allocation0 [shape = 'u32[]', space=smem, size = 0x4, offset = 0x4, fixed_abs, tag = 'smem constant byte address 0x4 - core index']
  #allocation1 [shape = 'u32[144,128]{1,0:T(1,128)}', space=vmem, size = 0x12000, scoped, tag = 'internal scratch']
  %s0 = inlined_call_operand.vmem [shape: f32[16,64], index: 0, kind: input, shape index: {}]
  %s1 = inlined_call_operand.hbm [shape: f32[376,128], index: 1, kind: input, shape index: {}]
  %s2 = inlined_call_operand.hbm [shape: f32[16,32], index: 2, kind: output, shape index: {}]
  %s3 = sld [smem:[#allocation0]]
  $region22: #{cross_modal_encoder.1} parent=0
    _
  %s5 = ssub.s32 1, %s3
  %s6 = scalar_select 0, %s5, %s3
  $region1: #{cross_modal_encoder.1} parent=0
    #allocation2 [shape = 'u8[192512]{0}', space=vmem, size = 0x2f000, scoped, tag = 'input window, operand 1, single buffered']
    #allocation3 [shape = 's32[1]{0}', space=sflag, size = 0x4, scoped, tag = 'scoped memory for cross_modal_encoder.1']
    #allocation4 [shape = 's32[1]{0}', space=sflag, size = 0x4, scoped, tag = 'scoped memory for cross_modal_encoder.1']
    #allocation5 [shape = 'u8[8192]{0}', space=vmem, size = 0x2000, scoped, tag = 'output window, operand 0, single buffered']
    %7 = vsyncpa [#allocation3], 0
    %8 = vsyncpa [#allocation4], 0
    // Predicated region
    $region2: #{cross_modal_encoder.1} parent=1 // pred_check
      _
    $region3: #{cross_modal_encoder.1} parent=1 // pred_check_branch
      %10 = sbr.rel (0) target = $region5
    $region4: #{cross_modal_encoder.1} parent=1 // pred_region
      _
    $region5: #{cross_modal_encoder.1} parent=1 // pred_fallthru
      _
    // Predicated region
    $region6: #{cross_modal_encoder.1} parent=1 // pred_check
      _
    $region7: #{cross_modal_encoder.1} parent=1 // pred_check_branch
      %12 = sbr.rel (0) target = $region9
    $region8: #{cross_modal_encoder.1} parent=1 // pred_region
      %s14 = ssub.s32 6016, 6016
      %15 = vsyncadd [#allocation3], %s14
      %s16 = sshll.u32 [#allocation2], 4
      %s17 = int_to_ptr.vmem [resolvable:$true] %s16
      %22 = dma.hbm_to_vmem [thread:$0]  %s1, 6016, %s17, [#allocation3], 128, 128, 8
    $region9: #{cross_modal_encoder.1} parent=1 // pred_fallthru
      _
    // Predicated region
    $region10: #{cross_modal_encoder.1} parent=1 // pred_check
      _
    $region11: #{cross_modal_encoder.1} parent=1 // pred_check_branch
      %24 = sbr.rel (0) target = $region13
    $region12: #{cross_modal_encoder.1} parent=1 // pred_region
      %25 = dma.done [#allocation3], 6016
    $region13: #{cross_modal_encoder.1} parent=1 // pred_fallthru
      _
    %v26 = vld [vmem:[%s0] sm:$0xff]
    %v27 = vld [vmem:[%s0 + $0x8] sm:$0xff]
    %v28 = vld [vmem:[#allocation2 + $0xe0] sm:$0xff]
    %v29 = vld [vmem:[#allocation2] sm:$0xff]
    %v30 = vld [vmem:[#allocation2 + $0x8] sm:$0xff]
    %v31 = vld [vmem:[#allocation2 + $0x10] sm:$0xff]
    %v32 = vld [vmem:[#allocation2 + $0x18] sm:$0xff]
    %v33 = vld [vmem:[#allocation2 + $0x20] sm:$0xff]
    %v34 = vld [vmem:[#allocation2 + $0x28] sm:$0xff]
    %v35 = vld [vmem:[#allocation2 + $0x30] sm:$0xff]
    %v36 = vld [vmem:[#allocation2 + $0x38] sm:$0xff]
    %v37 = vlaneseq
    %v38 = vshrl.u32 %v37, 7
    %v39 = vsub.s32 0, %v38
    %v40 = vrot.slane %v28, %v39
    %vm41 = vcmask 523264
    %v43 = vsel %vm41, %v26, 0
    %v46 = vsel %vm41, %v27, 0
    %48 = vmatprep.subr.mxu0 0.0
    %49 = vmatpush1.msra.mxu0 %v29
    %50 = vmatprep.subr.mxu0 0.0
    %51 = vmatpush1.msra.mxu0 %v30
    %52 = vmatprep.subr.mxu0 0.0
    %53 = vmatpush1.msra.mxu0 %v31
    %54 = vmatprep.subr.mxu0 0.0
    %55 = vmatpush1.msra.mxu0 %v32
    %56 = vmatprep.subr.mxu0 0.0
    %57 = vmatpush1.msra.mxu0 %v33
    %58 = vmatprep.subr.mxu0 0.0
    %59 = vmatpush1.msra.mxu0 %v34
    %60 = vmatprep.subr.mxu0 0.0
    %61 = vmatpush1.msra.mxu0 %v35
    %62 = vmatprep.subr.mxu0 0.0
    %63 = vmatpush1.msra.mxu0 %v36
    %64 = vmatprep.subr.mxu0 0.0
    %65 = vmatpush1.msra.mxu0 0.0
    %66 = vmatprep.subr.mxu0 0.0
    %67 = vmatpush1.msra.mxu0 0.0
    %68 = vmatprep.subr.mxu0 0.0
    %69 = vmatpush1.msra.mxu0 0.0
    %70 = vmatprep.subr.mxu0 0.0
    %71 = vmatpush1.msra.mxu0 0.0
    %72 = vmatprep.subr.mxu0 0.0
    %73 = vmatpush1.msra.mxu0 0.0
    %74 = vmatprep.subr.mxu0 0.0
    %75 = vmatpush1.msra.mxu0 0.0
    %76 = vmatprep.subr.mxu0 0.0
    %77 = vmatpush1.msra.mxu0 0.0
    %78 = vmatprep.subr.mxu0 0.0
    %79 = vmatpush1.msra.mxu0 0.0
    %80 = vmatprep.subr.mxu0 0.0
    %81 = vmatpush1.msra.mxu0 0.0
    %82 = vmatprep.subr.mxu0 0.0
    %83 = vmatpush1.msra.mxu0 0.0
    %84 = vmatprep.subr.mxu0 0.0
    %85 = vmatpush1.msra.mxu0 0.0
    %86 = vmatprep.subr.mxu0 0.0
    %87 = vmatpush1.msra.mxu0 0.0
    %88 = vmatprep.subr.mxu0 0.0
    %89 = vmatpush1.msra.mxu0 0.0
    %90 = vmatprep.subr.mxu0 0.0
    %91 = vmatpush1.msra.mxu0 0.0
    %92 = vmatprep.subr.mxu0 0.0
    %93 = vmatpush1.msra.mxu0 0.0
    %94 = vmatprep.subr.mxu0 0.0
    %95 = vmatpush1.msra.mxu0 0.0
    %96 = vmatprep.subr.mxu0 0.0
    %97 = vmatpush1.msra.mxu0 0.0
    %98 = vmatprep.subr.mxu0 0.0
    %99 = vmatpush1.msra.mxu0 0.0
    %100 = vmatprep.subr.mxu0 0.0
    %101 = vmatpush1.msra.mxu0 0.0
    %102 = vmatprep.subr.mxu0 0.0
    %103 = vmatpush1.msra.mxu0 0.0
    %104 = vmatprep.subr.mxu0 0.0
    %105 = vmatpush1.msra.mxu0 0.0
    %106 = vmatprep.subr.mxu0 0.0
    %107 = vmatpush1.msra.mxu0 0.0
    %108 = vmatprep.subr.mxu0 0.0
    %109 = vmatpush1.msra.mxu0 0.0
    %110 = vmatprep.subr.mxu0 0.0
    %111 = vmatpush1.msra.mxu0 0.0
    %112 = vmatprep.mubr.f32.mxu0 0.0
    %113 = vmatmul.mubr.f32.gmra.mrb[0].mxu0 %v43
    %v114 = vpop.f32.mrb[0].mxu0
    %v115 = vadd.f32 %v40, %v114
    %v116 = vpop.f32.mrb[0].mxu0
    %117 = vmatprep.mubr.f32.mxu0 0.0
    %118 = vmatmul.mubr.f32.gmra.mrb[0].mxu0 %v46
    %v119 = vpop.f32.mrb[0].mxu0
    %v120 = vadd.f32 %v40, %v119
    %v121 = vpop.f32.mrb[0].mxu0
    %122 = vdwg.mxu0
    %v123 = vld [vmem:[#allocation2 + $0xe8] sm:$0xff]
    %v124 = vld [vmem:[#allocation2 + $0xf0] sm:$0xff]
    %v125 = vld [vmem:[#allocation2 + $0xf8] sm:$0xff]
    %v126 = vld [vmem:[#allocation2 + $0x100] sm:$0xff]
    %v127 = vld [vmem:[#allocation2 + $0x108] sm:$0xff]
    %v128 = vld [vmem:[#allocation2 + $0x110] sm:$0xff]
    %v129 = vld [vmem:[#allocation2 + $0x118] sm:$0xff]
    %v130 = vld [vmem:[#allocation2 + $0x120] sm:$0xff]
    %139 = vrot.lane.b32.xlu0 %v123, 32
    %v140 = vpop.permute.xlu0 %139
    %141 = vrot.lane.b32.xlu0 %v124, 32
    %v142 = vpop.permute.xlu0 %141
    %143 = vrot.lane.b32.xlu0 %v125, 32
    %v144 = vpop.permute.xlu0 %143
    %145 = vrot.lane.b32.xlu0 %v126, 32
    %v146 = vpop.permute.xlu0 %145
    %147 = vrot.lane.b32.xlu0 %v127, 32
    %v148 = vpop.permute.xlu0 %147
    %149 = vrot.lane.b32.xlu0 %v128, 32
    %v150 = vpop.permute.xlu0 %149
    %151 = vrot.lane.b32.xlu0 %v129, 32
    %v152 = vpop.permute.xlu0 %151
    %153 = vrot.lane.b32.xlu0 %v130, 32
    %v154 = vpop.permute.xlu0 %153
    %v163 = vmul.f32 %v115, %v140
    %v164 = vmul.f32 %v120, %v142
    %v165 = vmul.f32 %v115, %v144
    %v166 = vmul.f32 %v120, %v146
    %v167 = vmul.f32 %v115, %v148
    %v168 = vmul.f32 %v120, %v150
    %v169 = vmul.f32 %v115, %v152
    %v170 = vmul.f32 %v120, %v154
    %v171 = vld [vmem:[#allocation2 + $0x168] sm:$0xff]
    %v172 = vld [vmem:[#allocation2 + $0x170] sm:$0xff]
    %181 = vrot.lane.b32.xlu0 %v163, 96
    %v182 = vpop.permute.xlu0 %181
    %183 = vrot.lane.b32.xlu0 %v164, 96
    %v184 = vpop.permute.xlu0 %183
    %185 = vrot.lane.b32.xlu0 %v165, 96
    %v186 = vpop.permute.xlu0 %185
    %187 = vrot.lane.b32.xlu0 %v166, 96
    %v188 = vpop.permute.xlu0 %187
    %189 = vrot.lane.b32.xlu0 %v167, 96
    %v190 = vpop.permute.xlu0 %189
    %191 = vrot.lane.b32.xlu0 %v168, 96
    %v192 = vpop.permute.xlu0 %191
    %193 = vrot.lane.b32.xlu0 %v169, 96
    %v194 = vpop.permute.xlu0 %193
    %195 = vrot.lane.b32.xlu0 %v170, 96
    %v196 = vpop.permute.xlu0 %195
    %vm197 = vcmask 261120
    %v199 = vsel %vm197, %v115, 0
    %v202 = vsel %vm197, %v120, 0
    %v204 = vsel %vm197, %v182, 0
    %v206 = vsel %vm197, %v184, 0
    %v208 = vsel %vm197, %v186, 0
    %v210 = vsel %vm197, %v188, 0
    %v212 = vsel %vm197, %v190, 0
    %v214 = vsel %vm197, %v192, 0
    %v216 = vsel %vm197, %v194, 0
    %v218 = vsel %vm197, %v196, 0
    %220 = vmatprep.subr.mxu0 0.0
    %221 = vmatpush1.xpose.msra.mxu0 %v204
    %222 = vmatprep.subr.mxu0 0.0
    %223 = vmatpush1.xpose.msra.mxu0 %v206
    %224 = vmatprep.subr.mxu0 0.0
    %225 = vmatpush1.xpose.msra.mxu0 %v208
    %226 = vmatprep.subr.mxu0 0.0
    %227 = vmatpush1.xpose.msra.mxu0 %v210
    %228 = vmatprep.subr.mxu0 0.0
    %229 = vmatpush1.xpose.msra.mxu0 %v212
    %230 = vmatprep.subr.mxu0 0.0
    %231 = vmatpush1.xpose.msra.mxu0 %v214
    %232 = vmatprep.subr.mxu0 0.0
    %233 = vmatpush1.xpose.msra.mxu0 %v216
    %234 = vmatprep.subr.mxu0 0.0
    %235 = vmatpush1.xpose.msra.mxu0 %v218
    %236 = vmatprep.subr.mxu0 0.0
    %237 = vmatpush1.xpose.msra.mxu0 0.0
    %238 = vmatprep.subr.mxu0 0.0
    %239 = vmatpush1.xpose.msra.mxu0 0.0
    %240 = vmatprep.subr.mxu0 0.0
    %241 = vmatpush1.xpose.msra.mxu0 0.0
    %242 = vmatprep.subr.mxu0 0.0
    %243 = vmatpush1.xpose.msra.mxu0 0.0
    %244 = vmatprep.subr.mxu0 0.0
    %245 = vmatpush1.xpose.msra.mxu0 0.0
    %246 = vmatprep.subr.mxu0 0.0
    %247 = vmatpush1.xpose.msra.mxu0 0.0
    %248 = vmatprep.subr.mxu0 0.0
    %249 = vmatpush1.xpose.msra.mxu0 0.0
    %250 = vmatprep.subr.mxu0 0.0
    %251 = vmatpush1.xpose.msra.mxu0 0.0
    %252 = vmatprep.subr.mxu0 0.0
    %253 = vmatpush1.xpose.msra.mxu0 0.0
    %254 = vmatprep.subr.mxu0 0.0
    %255 = vmatpush1.xpose.msra.mxu0 0.0
    %256 = vmatprep.subr.mxu0 0.0
    %257 = vmatpush1.xpose.msra.mxu0 0.0
    %258 = vmatprep.subr.mxu0 0.0
    %259 = vmatpush1.xpose.msra.mxu0 0.0
    %260 = vmatprep.subr.mxu0 0.0
    %261 = vmatpush1.xpose.msra.mxu0 0.0
    %262 = vmatprep.subr.mxu0 0.0
    %263 = vmatpush1.xpose.msra.mxu0 0.0
    %264 = vmatprep.subr.mxu0 0.0
    %265 = vmatpush1.xpose.msra.mxu0 0.0
    %266 = vmatprep.subr.mxu0 0.0
    %267 = vmatpush1.xpose.msra.mxu0 0.0
    %268 = vmatprep.subr.mxu0 0.0
    %269 = vmatpush1.xpose.msra.mxu0 0.0
    %270 = vmatprep.subr.mxu0 0.0
    %271 = vmatpush1.xpose.msra.mxu0 0.0
    %272 = vmatprep.subr.mxu0 0.0
    %273 = vmatpush1.xpose.msra.mxu0 0.0
    %274 = vmatprep.subr.mxu0 0.0
    %275 = vmatpush1.xpose.msra.mxu0 0.0
    %276 = vmatprep.subr.mxu0 0.0
    %277 = vmatpush1.xpose.msra.mxu0 0.0
    %278 = vmatprep.subr.mxu0 0.0
    %279 = vmatpush1.xpose.msra.mxu0 0.0
    %280 = vmatprep.subr.mxu0 0.0
    %281 = vmatpush1.xpose.msra.mxu0 0.0
    %282 = vmatprep.subr.mxu0 0.0
    %283 = vmatpush1.xpose.msra.mxu0 0.0
    %284 = vmatprep.mubr.f32.mxu0 0.0
    %285 = vmatmul.mubr.f32.gmra.mrb[0].mxu0 %v199
    %v286 = vpop.f32.mrb[0].mxu0
    %v287 = vadd.f32 %v171, %v286
    %v288 = vpop.f32.mrb[0].mxu0
    %289 = vmatprep.mubr.f32.mxu0 0.0
    %290 = vmatmul.mubr.f32.gmra.mrb[0].mxu0 %v202
    %v291 = vpop.f32.mrb[0].mxu0
    %v292 = vadd.f32 %v172, %v291
    %v293 = vpop.f32.mrb[0].mxu0
    %294 = vdwg.mxu0
    %v295 = vld [vmem:[#allocation2 + $0x128] sm:$0xff]
    %v296 = vld [vmem:[#allocation2 + $0x130] sm:$0xff]
    %v297 = vld [vmem:[#allocation2 + $0x138] sm:$0xff]
    %v298 = vld [vmem:[#allocation2 + $0x140] sm:$0xff]
    %v299 = vld [vmem:[#allocation2 + $0x148] sm:$0xff]
    %v300 = vld [vmem:[#allocation2 + $0x150] sm:$0xff]
    %v301 = vld [vmem:[#allocation2 + $0x158] sm:$0xff]
    %v302 = vld [vmem:[#allocation2 + $0x160] sm:$0xff]
    %vm303 = vcmask 130048
    %v304 = vsel %vm303, %v287, -inf
    %305 = vmax.xlane.f32.xlu0 %v304
    %v306 = vpop.xlane.xlu0 %305
    %v307 = vsel %vm303, %v292, -inf
    %308 = vmax.xlane.f32.xlu0 %v307
    %v309 = vpop.xlane.xlu0 %308
    %v310 = vlaneseq
    %v311 = vshrl.u32 %v310, 7
    %v312 = vsub.s32 0, %v311
    %v313 = vrot.slane %v295, %v312
    %v314 = vmul.f32 %v306, %v313
    %v315 = vmul.f32 %v309, %v313
    %vm316 = vcmask 261248
    %v317 = vsel %vm316, %v287, -inf
    %318 = vmax.xlane.f32.xlu0 %v317
    %v319 = vpop.xlane.xlu0 %318
    %v320 = vsel %vm316, %v292, -inf
    %321 = vmax.xlane.f32.xlu0 %v320
    %v322 = vpop.xlane.xlu0 %321
    %v323 = vlaneseq
    %v324 = vshrl.u32 %v323, 7
    %v325 = vsub.s32 0, %v324
    %v326 = vrot.slane %v297, %v325
    %v327 = vmul.f32 %v319, %v326
    %v328 = vmul.f32 %v322, %v326
    %v329 = vadd.f32 %v314, %v327
    %v330 = vadd.f32 %v315, %v328
    %vm331 = vcmask 392448
    %v332 = vsel %vm331, %v287, -inf
    %333 = vmax.xlane.f32.xlu0 %v332
    %v334 = vpop.xlane.xlu0 %333
    %v335 = vsel %vm331, %v292, -inf
    %336 = vmax.xlane.f32.xlu0 %v335
    %v337 = vpop.xlane.xlu0 %336
    %v338 = vlaneseq
    %v339 = vshrl.u32 %v338, 7
    %v340 = vsub.s32 0, %v339
    %v341 = vrot.slane %v299, %v340
    %v342 = vmul.f32 %v334, %v341
    %v343 = vmul.f32 %v337, %v341
    %v344 = vadd.f32 %v329, %v342
    %v345 = vadd.f32 %v330, %v343
    %vm346 = vcmask 523648
    %v347 = vsel %vm346, %v287, -inf
    %348 = vmax.xlane.f32.xlu0 %v347
    %v349 = vpop.xlane.xlu0 %348
    %v350 = vsel %vm346, %v292, -inf
    %351 = vmax.xlane.f32.xlu0 %v350
    %v352 = vpop.xlane.xlu0 %351
    %v353 = vlaneseq
    %v354 = vshrl.u32 %v353, 7
    %v355 = vsub.s32 0, %v354
    %v356 = vrot.slane %v301, %v355
    %v357 = vmul.f32 %v349, %v356
    %v358 = vmul.f32 %v352, %v356
    %v359 = vadd.f32 %v344, %v357
    %v360 = vadd.f32 %v345, %v358
    %v361 = vsub.f32 %v287, %v359
    %v362 = vsub.f32 %v292, %v360
    %v363 = vmul.f32 %v361, 1.442695
    %v364 = vpow.pop %v363
    %v365 = vmul.f32 %v362, 1.442695
    %v366 = vpow.pop %v365
    %v368 = vsel %vm41, %v364, 0
    %v371 = vsel %vm41, %v366, 0
    %373 = vmatprep.subr.mxu0 0.0
    %374 = vmatpush1.msra.mxu0 %v295
    %375 = vmatprep.subr.mxu0 0.0
    %376 = vmatpush1.msra.mxu0 %v296
    %377 = vmatprep.subr.mxu0 0.0
    %378 = vmatpush1.msra.mxu0 %v297
    %379 = vmatprep.subr.mxu0 0.0
    %380 = vmatpush1.msra.mxu0 %v298
    %381 = vmatprep.subr.mxu0 0.0
    %382 = vmatpush1.msra.mxu0 %v299
    %383 = vmatprep.subr.mxu0 0.0
    %384 = vmatpush1.msra.mxu0 %v300
    %385 = vmatprep.subr.mxu0 0.0
    %386 = vmatpush1.msra.mxu0 %v301
    %387 = vmatprep.subr.mxu0 0.0
    %388 = vmatpush1.msra.mxu0 %v302
    %389 = vmatprep.subr.mxu0 0.0
    %390 = vmatpush1.msra.mxu0 0.0
    %391 = vmatprep.subr.mxu0 0.0
    %392 = vmatpush1.msra.mxu0 0.0
    %393 = vmatprep.subr.mxu0 0.0
    %394 = vmatpush1.msra.mxu0 0.0
    %395 = vmatprep.subr.mxu0 0.0
    %396 = vmatpush1.msra.mxu0 0.0
    %397 = vmatprep.subr.mxu0 0.0
    %398 = vmatpush1.msra.mxu0 0.0
    %399 = vmatprep.subr.mxu0 0.0
    %400 = vmatpush1.msra.mxu0 0.0
    %401 = vmatprep.subr.mxu0 0.0
    %402 = vmatpush1.msra.mxu0 0.0
    %403 = vmatprep.subr.mxu0 0.0
    %404 = vmatpush1.msra.mxu0 0.0
    %405 = vmatprep.subr.mxu0 0.0
    %406 = vmatpush1.msra.mxu0 0.0
    %407 = vmatprep.subr.mxu0 0.0
    %408 = vmatpush1.msra.mxu0 0.0
    %409 = vmatprep.subr.mxu0 0.0
    %410 = vmatpush1.msra.mxu0 0.0
    %411 = vmatprep.subr.mxu0 0.0
    %412 = vmatpush1.msra.mxu0 0.0
    %413 = vmatprep.subr.mxu0 0.0
    %414 = vmatpush1.msra.mxu0 0.0
    %415 = vmatprep.subr.mxu0 0.0
    %416 = vmatpush1.msra.mxu0 0.0
    %417 = vmatprep.subr.mxu0 0.0
    %418 = vmatpush1.msra.mxu0 0.0
    %419 = vmatprep.subr.mxu0 0.0
    %420 = vmatpush1.msra.mxu0 0.0
    %421 = vmatprep.subr.mxu0 0.0
    %422 = vmatpush1.msra.mxu0 0.0
    %423 = vmatprep.subr.mxu0 0.0
    %424 = vmatpush1.msra.mxu0 0.0
    %425 = vmatprep.subr.mxu0 0.0
    %426 = vmatpush1.msra.mxu0 0.0
    %427 = vmatprep.subr.mxu0 0.0
    %428 = vmatpush1.msra.mxu0 0.0
    %429 = vmatprep.subr.mxu0 0.0
    %430 = vmatpush1.msra.mxu0 0.0
    %431 = vmatprep.subr.mxu0 0.0
    %432 = vmatpush1.msra.mxu0 0.0
    %433 = vmatprep.subr.mxu0 0.0
    %434 = vmatpush1.msra.mxu0 0.0
    %435 = vmatprep.subr.mxu0 0.0
    %436 = vmatpush1.msra.mxu0 0.0
    %437 = vmatprep.mubr.f32.mxu0 0.0
    %438 = vmatmul.mubr.f32.gmra.mrb[0].mxu0 %v368
    %v439 = vpop.f32.mrb[0].mxu0
    %v440 = vadd.f32 0.0, %v439
    %v441 = vpop.f32.mrb[0].mxu0
    %442 = vmatprep.mubr.f32.mxu0 0.0
    %443 = vmatmul.mubr.f32.gmra.mrb[0].mxu0 %v371
    %v444 = vpop.f32.mrb[0].mxu0
    %v445 = vadd.f32 0.0, %v444
    %v446 = vpop.f32.mrb[0].mxu0
    %447 = vdwg.mxu0
    %v448 = vrcp.pop %v440
    %v449 = vrcp.pop %v445
    %v450 = vmul.f32 %v364, %v448
    %v451 = vmul.f32 %v366, %v449
    %452 = vrot.lane.b32.xlu0 %v163, 64
    %v453 = vpop.permute.xlu0 %452
    %454 = vrot.lane.b32.xlu0 %v164, 64
    %v455 = vpop.permute.xlu0 %454
    %456 = vrot.lane.b32.xlu0 %v165, 64
    %v457 = vpop.permute.xlu0 %456
    %458 = vrot.lane.b32.xlu0 %v166, 64
    %v459 = vpop.permute.xlu0 %458
    %460 = vrot.lane.b32.xlu0 %v167, 64
    %v461 = vpop.permute.xlu0 %460
    %462 = vrot.lane.b32.xlu0 %v168, 64
    %v463 = vpop.permute.xlu0 %462
    %464 = vrot.lane.b32.xlu0 %v169, 64
    %v465 = vpop.permute.xlu0 %464
    %466 = vrot.lane.b32.xlu0 %v170, 64
    %v467 = vpop.permute.xlu0 %466
    %v477 = vsel %vm41, %v450, 0
    %v480 = vsel %vm41, %v451, 0
    %482 = vmatprep.subr.mxu0 0.0
    %483 = vmatpush1.msra.mxu0 %v453
    %484 = vmatprep.subr.mxu0 0.0
    %485 = vmatpush1.msra.mxu0 %v455
    %486 = vmatprep.subr.mxu0 0.0
    %487 = vmatpush1.msra.mxu0 %v457
    %488 = vmatprep.subr.mxu0 0.0
    %489 = vmatpush1.msra.mxu0 %v459
    %490 = vmatprep.subr.mxu0 0.0
    %491 = vmatpush1.msra.mxu0 %v461
    %492 = vmatprep.subr.mxu0 0.0
    %493 = vmatpush1.msra.mxu0 %v463
    %494 = vmatprep.subr.mxu0 0.0
    %495 = vmatpush1.msra.mxu0 %v465
    %496 = vmatprep.subr.mxu0 0.0
    %497 = vmatpush1.msra.mxu0 %v467
    %498 = vmatprep.subr.mxu0 0.0
    %499 = vmatpush1.msra.mxu0 0.0
    %500 = vmatprep.subr.mxu0 0.0
    %501 = vmatpush1.msra.mxu0 0.0
    %502 = vmatprep.subr.mxu0 0.0
    %503 = vmatpush1.msra.mxu0 0.0
    %504 = vmatprep.subr.mxu0 0.0
    %505 = vmatpush1.msra.mxu0 0.0
    %506 = vmatprep.subr.mxu0 0.0
    %507 = vmatpush1.msra.mxu0 0.0
    %508 = vmatprep.subr.mxu0 0.0
    %509 = vmatpush1.msra.mxu0 0.0
    %510 = vmatprep.subr.mxu0 0.0
    %511 = vmatpush1.msra.mxu0 0.0
    %512 = vmatprep.subr.mxu0 0.0
    %513 = vmatpush1.msra.mxu0 0.0
    %514 = vmatprep.subr.mxu0 0.0
    %515 = vmatpush1.msra.mxu0 0.0
    %516 = vmatprep.subr.mxu0 0.0
    %517 = vmatpush1.msra.mxu0 0.0
    %518 = vmatprep.subr.mxu0 0.0
    %519 = vmatpush1.msra.mxu0 0.0
    %520 = vmatprep.subr.mxu0 0.0
    %521 = vmatpush1.msra.mxu0 0.0
    %522 = vmatprep.subr.mxu0 0.0
    %523 = vmatpush1.msra.mxu0 0.0
    %524 = vmatprep.subr.mxu0 0.0
    %525 = vmatpush1.msra.mxu0 0.0
    %526 = vmatprep.subr.mxu0 0.0
    %527 = vmatpush1.msra.mxu0 0.0
    %528 = vmatprep.subr.mxu0 0.0
    %529 = vmatpush1.msra.mxu0 0.0
    %530 = vmatprep.subr.mxu0 0.0
    %531 = vmatpush1.msra.mxu0 0.0
    %532 = vmatprep.subr.mxu0 0.0
    %533 = vmatpush1.msra.mxu0 0.0
    %534 = vmatprep.subr.mxu0 0.0
    %535 = vmatpush1.msra.mxu0 0.0
    %536 = vmatprep.subr.mxu0 0.0
    %537 = vmatpush1.msra.mxu0 0.0
    %538 = vmatprep.subr.mxu0 0.0
    %539 = vmatpush1.msra.mxu0 0.0
    %540 = vmatprep.subr.mxu0 0.0
    %541 = vmatpush1.msra.mxu0 0.0
    %542 = vmatprep.subr.mxu0 0.0
    %543 = vmatpush1.msra.mxu0 0.0
    %544 = vmatprep.subr.mxu0 0.0
    %545 = vmatpush1.msra.mxu0 0.0
    %546 = vmatprep.mubr.f32.mxu0 0.0
    %547 = vmatmul.mubr.f32.gmra.mrb[0].mxu0 %v477
    %v548 = vpop.f32.mrb[0].mxu0
    %v549 = vadd.f32 0.0, %v548
    %v550 = vpop.f32.mrb[0].mxu0
    %551 = vmatprep.mubr.f32.mxu0 0.0
    %552 = vmatmul.mubr.f32.gmra.mrb[0].mxu0 %v480
    %v553 = vpop.f32.mrb[0].mxu0
    %v554 = vadd.f32 0.0, %v553
    %v555 = vpop.f32.mrb[0].mxu0
    %556 = vdwg.mxu0
    %v557 = vld [vmem:[#allocation2] sm:$0xff]
    %v558 = vld [vmem:[#allocation2 + $0x8] sm:$0xff]
    %v559 = vld [vmem:[#allocation2 + $0x10] sm:$0xff]
    %v560 = vld [vmem:[#allocation2 + $0x18] sm:$0xff]
    %v561 = vlaneseq
    %v562 = vshrl.u32 %v561, 7
    %v563 = vsub.s32 1, %v562
    %v564 = vrot.slane %v28, %v563
    %569 = vrot.lane.b32.xlu0 %v557, 32
    %v570 = vpop.permute.xlu0 %569
    %571 = vrot.lane.b32.xlu0 %v558, 32
    %v572 = vpop.permute.xlu0 %571
    %573 = vrot.lane.b32.xlu0 %v559, 32
    %v574 = vpop.permute.xlu0 %573
    %575 = vrot.lane.b32.xlu0 %v560, 32
    %v576 = vpop.permute.xlu0 %575
    %v582 = vsel %vm197, %v549, 0
    %v585 = vsel %vm197, %v554, 0
    %587 = vmatprep.subr.mxu0 0.0
    %588 = vmatpush1.msra.mxu0 %v570
    %589 = vmatprep.subr.mxu0 0.0
    %590 = vmatpush1.msra.mxu0 %v572
    %591 = vmatprep.subr.mxu0 0.0
    %592 = vmatpush1.msra.mxu0 %v574
    %593 = vmatprep.subr.mxu0 0.0
    %594 = vmatpush1.msra.mxu0 %v576
    %595 = vmatprep.subr.mxu0 0.0
    %596 = vmatpush1.msra.mxu0 0.0
    %597 = vmatprep.subr.mxu0 0.0
    %598 = vmatpush1.msra.mxu0 0.0
    %599 = vmatprep.subr.mxu0 0.0
    %600 = vmatpush1.msra.mxu0 0.0
    %601 = vmatprep.subr.mxu0 0.0
    %602 = vmatpush1.msra.mxu0 0.0
    %603 = vmatprep.subr.mxu0 0.0
    %604 = vmatpush1.msra.mxu0 0.0
    %605 = vmatprep.subr.mxu0 0.0
    %606 = vmatpush1.msra.mxu0 0.0
    %607 = vmatprep.subr.mxu0 0.0
    %608 = vmatpush1.msra.mxu0 0.0
    %609 = vmatprep.subr.mxu0 0.0
    %610 = vmatpush1.msra.mxu0 0.0
    %611 = vmatprep.subr.mxu0 0.0
    %612 = vmatpush1.msra.mxu0 0.0
    %613 = vmatprep.subr.mxu0 0.0
    %614 = vmatpush1.msra.mxu0 0.0
    %615 = vmatprep.subr.mxu0 0.0
    %616 = vmatpush1.msra.mxu0 0.0
    %617 = vmatprep.subr.mxu0 0.0
    %618 = vmatpush1.msra.mxu0 0.0
    %619 = vmatprep.subr.mxu0 0.0
    %620 = vmatpush1.msra.mxu0 0.0
    %621 = vmatprep.subr.mxu0 0.0
    %622 = vmatpush1.msra.mxu0 0.0
    %623 = vmatprep.subr.mxu0 0.0
    %624 = vmatpush1.msra.mxu0 0.0
    %625 = vmatprep.subr.mxu0 0.0
    %626 = vmatpush1.msra.mxu0 0.0
    %627 = vmatprep.subr.mxu0 0.0
    %628 = vmatpush1.msra.mxu0 0.0
    %629 = vmatprep.subr.mxu0 0.0
    %630 = vmatpush1.msra.mxu0 0.0
    %631 = vmatprep.subr.mxu0 0.0
    %632 = vmatpush1.msra.mxu0 0.0
    %633 = vmatprep.subr.mxu0 0.0
    %634 = vmatpush1.msra.mxu0 0.0
    %635 = vmatprep.subr.mxu0 0.0
    %636 = vmatpush1.msra.mxu0 0.0
    %637 = vmatprep.subr.mxu0 0.0
    %638 = vmatpush1.msra.mxu0 0.0
    %639 = vmatprep.subr.mxu0 0.0
    %640 = vmatpush1.msra.mxu0 0.0
    %641 = vmatprep.subr.mxu0 0.0
    %642 = vmatpush1.msra.mxu0 0.0
    %643 = vmatprep.subr.mxu0 0.0
    %644 = vmatpush1.msra.mxu0 0.0
    %645 = vmatprep.subr.mxu0 0.0
    %646 = vmatpush1.msra.mxu0 0.0
    %647 = vmatprep.subr.mxu0 0.0
    %648 = vmatpush1.msra.mxu0 0.0
    %649 = vmatprep.subr.mxu0 0.0
    %650 = vmatpush1.msra.mxu0 0.0
    %651 = vmatprep.mubr.f32.mxu0 0.0
    %652 = vmatmul.mubr.f32.gmra.mrb[0].mxu0 %v582
    %v653 = vpop.f32.mrb[0].mxu0
    %v654 = vadd.f32 %v564, %v653
    %v655 = vpop.f32.mrb[0].mxu0
    %656 = vmatprep.mubr.f32.mxu0 0.0
    %657 = vmatmul.mubr.f32.gmra.mrb[0].mxu0 %v585
    %v658 = vpop.f32.mrb[0].mxu0
    %v659 = vadd.f32 %v564, %v658
    %v660 = vpop.f32.mrb[0].mxu0
    %661 = vdwg.mxu0
    %v662 = vadd.f32 %v26, %v654
    %v663 = vadd.f32 %v27, %v659
    %v664 = vsel %vm197, %v662, 0.0
    %665 = vadd.xlane.f32.xlu0 %v664
    %v666 = vpop.xlane.xlu0 %665
    %v667 = vsel %vm197, %v663, 0.0
    %668 = vadd.xlane.f32.xlu0 %v667
    %v669 = vpop.xlane.xlu0 %668
    %v670 = vrcp.pop 32.0
    %v671 = vmul.f32 %v666, %v670
    %v672 = vmul.f32 %v669, %v670
    %v673 = vsub.f32 %v662, %v671
    %v674 = vsub.f32 %v663, %v672
    %v675 = vmul.f32 %v673, %v673
    %v676 = vmul.f32 %v674, %v674
    %v677 = vsel %vm197, %v675, 0.0
    %678 = vadd.xlane.f32.xlu0 %v677
    %v679 = vpop.xlane.xlu0 %678
    %v680 = vsel %vm197, %v676, 0.0
    %681 = vadd.xlane.f32.xlu0 %v680
    %v682 = vpop.xlane.xlu0 %681
    %v683 = vmul.f32 %v679, %v670
    %v684 = vmul.f32 %v682, %v670
    %v685 = vadd.f32 %v683, 1e-05
    %v686 = vadd.f32 %v684, 1e-05
    %v687 = vrsqrt.pop %v685
    %v688 = vrsqrt.pop %v686
    %v689 = vmul.f32 %v673, %v687
    %v690 = vmul.f32 %v674, %v688
    %v691 = vlaneseq
    %v692 = vshrl.u32 %v691, 7
    %v693 = vsub.s32 2, %v692
    %v694 = vrot.slane %v28, %v693
    %v695 = vmul.f32 %v689, %v694
    %v696 = vmul.f32 %v690, %v694
    %v697 = vlaneseq
    %v698 = vshrl.u32 %v697, 7
    %v699 = vsub.s32 3, %v698
    %v700 = vrot.slane %v28, %v699
    %v701 = vadd.f32 %v695, %v700
    %v702 = vadd.f32 %v696, %v700
    %v703 = vld [vmem:[#allocation2 + $0x40] sm:$0xff]
    %v704 = vld [vmem:[#allocation2 + $0x48] sm:$0xff]
    %v705 = vld [vmem:[#allocation2 + $0x50] sm:$0xff]
    %v706 = vld [vmem:[#allocation2 + $0x58] sm:$0xff]
    %v707 = vlaneseq
    %v708 = vshrl.u32 %v707, 7
    %v709 = vsub.s32 4, %v708
    %v710 = vrot.slane %v28, %v709
    %v712 = vsel %vm197, %v701, 0
    %v715 = vsel %vm197, %v702, 0
    %717 = vmatprep.subr.mxu0 0.0
    %718 = vmatpush1.msra.mxu0 %v703
    %719 = vmatprep.subr.mxu0 0.0
    %720 = vmatpush1.msra.mxu0 %v704
    %721 = vmatprep.subr.mxu0 0.0
    %722 = vmatpush1.msra.mxu0 %v705
    %723 = vmatprep.subr.mxu0 0.0
    %724 = vmatpush1.msra.mxu0 %v706
    %725 = vmatprep.subr.mxu0 0.0
    %726 = vmatpush1.msra.mxu0 0.0
    %727 = vmatprep.subr.mxu0 0.0
    %728 = vmatpush1.msra.mxu0 0.0
    %729 = vmatprep.subr.mxu0 0.0
    %730 = vmatpush1.msra.mxu0 0.0
    %731 = vmatprep.subr.mxu0 0.0
    %732 = vmatpush1.msra.mxu0 0.0
    %733 = vmatprep.subr.mxu0 0.0
    %734 = vmatpush1.msra.mxu0 0.0
    %735 = vmatprep.subr.mxu0 0.0
    %736 = vmatpush1.msra.mxu0 0.0
    %737 = vmatprep.subr.mxu0 0.0
    %738 = vmatpush1.msra.mxu0 0.0
    %739 = vmatprep.subr.mxu0 0.0
    %740 = vmatpush1.msra.mxu0 0.0
    %741 = vmatprep.subr.mxu0 0.0
    %742 = vmatpush1.msra.mxu0 0.0
    %743 = vmatprep.subr.mxu0 0.0
    %744 = vmatpush1.msra.mxu0 0.0
    %745 = vmatprep.subr.mxu0 0.0
    %746 = vmatpush1.msra.mxu0 0.0
    %747 = vmatprep.subr.mxu0 0.0
    %748 = vmatpush1.msra.mxu0 0.0
    %749 = vmatprep.subr.mxu0 0.0
    %750 = vmatpush1.msra.mxu0 0.0
    %751 = vmatprep.subr.mxu0 0.0
    %752 = vmatpush1.msra.mxu0 0.0
    %753 = vmatprep.subr.mxu0 0.0
    %754 = vmatpush1.msra.mxu0 0.0
    %755 = vmatprep.subr.mxu0 0.0
    %756 = vmatpush1.msra.mxu0 0.0
    %757 = vmatprep.subr.mxu0 0.0
    %758 = vmatpush1.msra.mxu0 0.0
    %759 = vmatprep.subr.mxu0 0.0
    %760 = vmatpush1.msra.mxu0 0.0
    %761 = vmatprep.subr.mxu0 0.0
    %762 = vmatpush1.msra.mxu0 0.0
    %763 = vmatprep.subr.mxu0 0.0
    %764 = vmatpush1.msra.mxu0 0.0
    %765 = vmatprep.subr.mxu0 0.0
    %766 = vmatpush1.msra.mxu0 0.0
    %767 = vmatprep.subr.mxu0 0.0
    %768 = vmatpush1.msra.mxu0 0.0
    %769 = vmatprep.subr.mxu0 0.0
    %770 = vmatpush1.msra.mxu0 0.0
    %771 = vmatprep.subr.mxu0 0.0
    %772 = vmatpush1.msra.mxu0 0.0
    %773 = vmatprep.subr.mxu0 0.0
    %774 = vmatpush1.msra.mxu0 0.0
    %775 = vmatprep.subr.mxu0 0.0
    %776 = vmatpush1.msra.mxu0 0.0
    %777 = vmatprep.subr.mxu0 0.0
    %778 = vmatpush1.msra.mxu0 0.0
    %779 = vmatprep.subr.mxu0 0.0
    %780 = vmatpush1.msra.mxu0 0.0
    %781 = vmatprep.mubr.f32.mxu0 0.0
    %782 = vmatmul.mubr.f32.gmra.mrb[0].mxu0 %v712
    %v783 = vpop.f32.mrb[0].mxu0
    %v784 = vadd.f32 %v710, %v783
    %v785 = vpop.f32.mrb[0].mxu0
    %786 = vmatprep.mubr.f32.mxu0 0.0
    %787 = vmatmul.mubr.f32.gmra.mrb[0].mxu0 %v715
    %v788 = vpop.f32.mrb[0].mxu0
    %v789 = vadd.f32 %v710, %v788
    %v790 = vpop.f32.mrb[0].mxu0
    %791 = vdwg.mxu0
    %v792 = vmul.f32 %v784, 0.5
    %v793 = vmul.f32 %v789, 0.5
    %v794 = vmul.f32 %v784, 0.70710677
    %v795 = vmul.f32 %v789, 0.70710677
    %v796 = verf.f32.pop %v794
    %v797 = verf.f32.pop %v795
    %v798 = vadd.f32 %v796, 1.0
    %v799 = vadd.f32 %v797, 1.0
    %v800 = vmul.f32 %v792, %v798
    %v801 = vmul.f32 %v793, %v799
    %v802 = vld [vmem:[#allocation2 + $0x60] sm:$0xff]
    %v803 = vld [vmem:[#allocation2 + $0x68] sm:$0xff]
    %v804 = vld [vmem:[#allocation2 + $0x70] sm:$0xff]
    %v805 = vld [vmem:[#allocation2 + $0x78] sm:$0xff]
    %v806 = vld [vmem:[#allocation2 + $0x80] sm:$0xff]
    %v807 = vld [vmem:[#allocation2 + $0x88] sm:$0xff]
    %v808 = vld [vmem:[#allocation2 + $0x90] sm:$0xff]
    %v809 = vld [vmem:[#allocation2 + $0x98] sm:$0xff]
    %v810 = vld [vmem:[#allocation2 + $0xa0] sm:$0xff]
    %v811 = vld [vmem:[#allocation2 + $0xa8] sm:$0xff]
    %v812 = vld [vmem:[#allocation2 + $0xb0] sm:$0xff]
    %v813 = vld [vmem:[#allocation2 + $0xb8] sm:$0xff]
    %v814 = vld [vmem:[#allocation2 + $0xc0] sm:$0xff]
    %v815 = vld [vmem:[#allocation2 + $0xc8] sm:$0xff]
    %v816 = vld [vmem:[#allocation2 + $0xd0] sm:$0xff]
    %v817 = vld [vmem:[#allocation2 + $0xd8] sm:$0xff]
    %v818 = vlaneseq
    %v819 = vshrl.u32 %v818, 7
    %v820 = vsub.s32 5, %v819
    %v821 = vrot.slane %v28, %v820
    %822 = vmatprep.subr.mxu0 0.0
    %823 = vmatpush1.msra.mxu0 %v802
    %824 = vmatprep.subr.mxu0 0.0
    %825 = vmatpush1.msra.mxu0 %v803
    %826 = vmatprep.subr.mxu0 0.0
    %827 = vmatpush1.msra.mxu0 %v804
    %828 = vmatprep.subr.mxu0 0.0
    %829 = vmatpush1.msra.mxu0 %v805
    %830 = vmatprep.subr.mxu0 0.0
    %831 = vmatpush1.msra.mxu0 %v806
    %832 = vmatprep.subr.mxu0 0.0
    %833 = vmatpush1.msra.mxu0 %v807
    %834 = vmatprep.subr.mxu0 0.0
    %835 = vmatpush1.msra.mxu0 %v808
    %836 = vmatprep.subr.mxu0 0.0
    %837 = vmatpush1.msra.mxu0 %v809
    %838 = vmatprep.subr.mxu0 0.0
    %839 = vmatpush1.msra.mxu0 %v810
    %840 = vmatprep.subr.mxu0 0.0
    %841 = vmatpush1.msra.mxu0 %v811
    %842 = vmatprep.subr.mxu0 0.0
    %843 = vmatpush1.msra.mxu0 %v812
    %844 = vmatprep.subr.mxu0 0.0
    %845 = vmatpush1.msra.mxu0 %v813
    %846 = vmatprep.subr.mxu0 0.0
    %847 = vmatpush1.msra.mxu0 %v814
    %848 = vmatprep.subr.mxu0 0.0
    %849 = vmatpush1.msra.mxu0 %v815
    %850 = vmatprep.subr.mxu0 0.0
    %851 = vmatpush1.msra.mxu0 %v816
    %852 = vmatprep.subr.mxu0 0.0
    %853 = vmatpush1.msra.mxu0 %v817
    %854 = vmatprep.subr.mxu0 0.0
    %855 = vmatpush1.msra.mxu0 0.0
    %856 = vmatprep.subr.mxu0 0.0
    %857 = vmatpush1.msra.mxu0 0.0
    %858 = vmatprep.subr.mxu0 0.0
    %859 = vmatpush1.msra.mxu0 0.0
    %860 = vmatprep.subr.mxu0 0.0
    %861 = vmatpush1.msra.mxu0 0.0
    %862 = vmatprep.subr.mxu0 0.0
    %863 = vmatpush1.msra.mxu0 0.0
    %864 = vmatprep.subr.mxu0 0.0
    %865 = vmatpush1.msra.mxu0 0.0
    %866 = vmatprep.subr.mxu0 0.0
    %867 = vmatpush1.msra.mxu0 0.0
    %868 = vmatprep.subr.mxu0 0.0
    %869 = vmatpush1.msra.mxu0 0.0
    %870 = vmatprep.subr.mxu0 0.0
    %871 = vmatpush1.msra.mxu0 0.0
    %872 = vmatprep.subr.mxu0 0.0
    %873 = vmatpush1.msra.mxu0 0.0
    %874 = vmatprep.subr.mxu0 0.0
    %875 = vmatpush1.msra.mxu0 0.0
    %876 = vmatprep.subr.mxu0 0.0
    %877 = vmatpush1.msra.mxu0 0.0
    %878 = vmatprep.subr.mxu0 0.0
    %879 = vmatpush1.msra.mxu0 0.0
    %880 = vmatprep.subr.mxu0 0.0
    %881 = vmatpush1.msra.mxu0 0.0
    %882 = vmatprep.subr.mxu0 0.0
    %883 = vmatpush1.msra.mxu0 0.0
    %884 = vmatprep.subr.mxu0 0.0
    %885 = vmatpush1.msra.mxu0 0.0
    %886 = vmatprep.mubr.f32.mxu0 0.0
    %887 = vmatmul.mubr.f32.gmra.mrb[0].mxu0 %v800
    %v888 = vpop.f32.mrb[0].mxu0
    %v889 = vadd.f32 %v821, %v888
    %v890 = vpop.f32.mrb[0].mxu0
    %891 = vmatprep.mubr.f32.mxu0 0.0
    %892 = vmatmul.mubr.f32.gmra.mrb[0].mxu0 %v801
    %v893 = vpop.f32.mrb[0].mxu0
    %v894 = vadd.f32 %v821, %v893
    %v895 = vpop.f32.mrb[0].mxu0
    %896 = vdwg.mxu0
    %v897 = vadd.f32 %v701, %v889
    %v898 = vadd.f32 %v702, %v894
    %v899 = vsel %vm197, %v897, 0.0
    %900 = vadd.xlane.f32.xlu0 %v899
    %v901 = vpop.xlane.xlu0 %900
    %v902 = vsel %vm197, %v898, 0.0
    %903 = vadd.xlane.f32.xlu0 %v902
    %v904 = vpop.xlane.xlu0 %903
    %v905 = vmul.f32 %v901, %v670
    %v906 = vmul.f32 %v904, %v670
    %v907 = vsub.f32 %v897, %v905
    %v908 = vsub.f32 %v898, %v906
    %v909 = vmul.f32 %v907, %v907
    %v910 = vmul.f32 %v908, %v908
    %v911 = vsel %vm197, %v909, 0.0
    %912 = vadd.xlane.f32.xlu0 %v911
    %v913 = vpop.xlane.xlu0 %912
    %v914 = vsel %vm197, %v910, 0.0
    %915 = vadd.xlane.f32.xlu0 %v914
    %v916 = vpop.xlane.xlu0 %915
    %v917 = vmul.f32 %v913, %v670
    %v918 = vmul.f32 %v916, %v670
    %v919 = vadd.f32 %v917, 1e-05
    %v920 = vadd.f32 %v918, 1e-05
    %v921 = vrsqrt.pop %v919
    %v922 = vrsqrt.pop %v920
    %v923 = vmul.f32 %v907, %v921
    %v924 = vmul.f32 %v908, %v922
    %v925 = vlaneseq
    %v926 = vshrl.u32 %v925, 7
    %v927 = vsub.s32 6, %v926
    %v928 = vrot.slane %v28, %v927
    %v929 = vmul.f32 %v923, %v928
    %v930 = vmul.f32 %v924, %v928
    %v931 = vlaneseq
    %v932 = vshrl.u32 %v931, 7
    %v933 = vsub.s32 7, %v932
    %v934 = vrot.slane %v28, %v933
    %v935 = vadd.f32 %v929, %v934
    %v936 = vadd.f32 %v930, %v934
    %937 = vst.msk [vmem:[#allocation5] sm:$0xff] %vm197, %v935
    %938 = vst.msk [vmem:[#allocation5 + $0x8] sm:$0xff] %vm197, %v936
    // Predicated region
    $region14: #{cross_modal_encoder.1} parent=1 // pred_check
      _
    $region15: #{cross_modal_encoder.1} parent=1 // pred_check_branch
      %940 = sbr.rel (0) target = $region17
    $region16: #{cross_modal_encoder.1} parent=1 // pred_region
      %s942 = ssub.s32 256, 256
      %943 = vsyncadd [#allocation4], %s942
      %s944 = sshll.u32 [#allocation5], 4
      %s945 = int_to_ptr.vmem [resolvable:$true] %s944
      %950 = dma.vmem_to_hbm [thread:$0]  %s945, 256, %s2, [#allocation4], 128, 128, 8
    $region17: #{cross_modal_encoder.1} parent=1 // pred_fallthru
      _
    // Predicated region
    $region18: #{cross_modal_encoder.1} parent=1 // pred_check
      _
    $region19: #{cross_modal_encoder.1} parent=1 // pred_check_branch
      %952 = sbr.rel (0) target = $region21
    $region20: #{cross_modal_encoder.1} parent=1 // pred_region
      %953 = dma.done [#allocation4], 256
    $region21: #{cross_modal_encoder.1} parent=1 // pred_fallthru
      _
    %954 = vsyncpa [#allocation3], 1
    %955 = vsyncpa [#allocation4], 1

</llo_original>
